<compile_context>
chip_gen: v7x
topology: tpu7x:2x2x1
jax: 0.10.0
libtpu: 0.0.40
codegen_flags: <defaults>
</compile_context>

<pallas_src>
import jax
import jax.numpy as jnp
from jax.experimental import pallas as pl
from jax.experimental.pallas import tpu as pltpu


def _downsampler_kernel(x_ref, w_ref, o_ref):
    # x_ref: (1, 4*C, TP)  space-to-depth tile, spatial P on the lane dim
    # w_ref: (Cout, 4*C)   1x1-conv weight replicated 4x and pre-scaled by 0.25
    # o_ref: (1, Cout, TP)
    # Fused 2x2 average pool + 1x1 conv == a single MXU matmul (f32 accumulate).
    o_ref[0] = jnp.dot(
        w_ref[...], x_ref[0], preferred_element_type=jnp.float32
    ).astype(o_ref.dtype)


def _pick_spatial_tile(p, target=2048):
    """Largest lane-tile <= target (multiple of 128) that divides P, else full/target."""
    if p <= target:
        return p
    for tp in range(target, 127, -128):
        if p % tp == 0:
            return tp
    return target  # partial final block: per-lane independent, Pallas pads/drops OOB lanes


def downsampler_pallas(x_nchw, weight_oihw, *, tile_p=None):
    """x_nchw: (N, C, H, W); weight_oihw: (Cout, C, 1, 1). Returns (N, Cout, H//2, W//2)."""
    n, c, h, w = x_nchw.shape
    cout = weight_oihw.shape[0]
    if h % 2 or w % 2:
        # TODO(synk): odd H/W needs true bilinear taps; 2x2 mean only matches even dims.
        raise ValueError("DownSampler Pallas kernel requires even H and W")
    ho, wo = h // 2, w // 2
    p = ho * wo

    # --- glue: NCHW -> space-to-depth with spatial P as the last (lane) axis ---
    # (n, c, ho, 2, wo, 2) -> (n, dh, dw, c, ho, wo) -> (n, 4*c, p)
    x_s2d = jnp.transpose(
        x_nchw.reshape(n, c, ho, 2, wo, 2), (0, 3, 5, 1, 2, 4)
    ).reshape(n, 4 * c, p)

    # Fold the 2x2 mean pool into the weight (one-time O(C*Cout) host-side cost):
    #   out[o, p] = sum_{dh,dw,c} 0.25 * W[o, c] * x[(dh,dw,c), p]
    w_big = (0.25 * jnp.tile(weight_oihw[:, :, 0, 0], (1, 4))).astype(x_nchw.dtype)

    tp = tile_p if tile_p is not None else _pick_spatial_tile(p)
    grid = (n, pl.cdiv(p, tp))

    out_s2d = pl.pallas_call(
        _downsampler_kernel,
        out_shape=jax.ShapeDtypeStruct((n, cout, p), x_nchw.dtype),
        grid_spec=pltpu.PrefetchScalarGridSpec(
            num_scalar_prefetch=0,
            grid=grid,
            in_specs=[
                pl.BlockSpec((1, 4 * c, tp), lambda b, t: (b, 0, t)),
                pl.BlockSpec((cout, 4 * c), lambda b, t: (0, 0)),
            ],
            out_specs=pl.BlockSpec((1, cout, tp), lambda b, t: (b, 0, t)),
        ),
        compiler_params=pltpu.CompilerParams(
            dimension_semantics=("parallel", "parallel"),
            vmem_limit_bytes=32 * 1024 * 1024,  # explicit: safe on v5e/v6e/v7x
        ),
    )(x_s2d, w_big)

    # (n, cout, p) is already NCHW-ordered -> pure (free) reshape, no transpose.
    return out_s2d.reshape(n, cout, ho, wo)


def downsampler_reference(x_nchw, weight_oihw):
    """Plain-JAX reference: 2x2 avg pool + 1x1 conv (matches PyTorch semantics)."""
    n, c, h, w = x_nchw.shape
    pooled = x_nchw.reshape(n, c, h // 2, 2, w // 2, 2).mean(axis=(3, 5))
    w_mat = weight_oihw[:, :, 0, 0]  # (Cout, Cin)
    return jnp.einsum('nchw,oc->nohw', pooled, w_mat)


if __name__ == "__main__":
    key = jax.random.PRNGKey(0)
    k_x, k_w = jax.random.split(key)

    N, C_IN, C_OUT, H, W = 2, 4, 8, 16, 16
    x = jax.random.normal(k_x, (N, C_IN, H, W), dtype=jnp.float32)
    # Conv2d(in_feat, out_feat, kernel_size=1, bias=False, groups=1) weight:
    weight = jax.random.normal(k_w, (C_OUT, C_IN, 1, 1), dtype=jnp.float32) * 0.1

    out = downsampler_pallas(x, weight)
    out = jax.block_until_ready(out)

    ref = downsampler_reference(x, weight)
    assert out.shape == (N, C_OUT, H // 2, W // 2), out.shape
    assert jnp.allclose(out, ref, atol=1e-5, rtol=1e-5), "mismatch vs reference"

    print("KERNEL_OK")
</pallas_src>

<mosaic_0001>
module attributes {stable_mosaic.version = 11 : i64} {
  func.func @_downsampler_kernel(%arg0: i32, %arg1: i32, %arg2: memref<1x16x64xf32, #tpu.memory_space<vmem>>, %arg3: memref<8x16xf32, #tpu.memory_space<vmem>>, %arg4: memref<1x8x64xf32, #tpu.memory_space<vmem>>) attributes {dimension_semantics = [#tpu.dimension_semantics<parallel>, #tpu.dimension_semantics<parallel>], iteration_bounds = array<i64: 2, 1>, scalar_prefetch = 0 : i64, scratch_operands = 0 : i64, tpu.core_type = #tpu.core_type<tc>, window_params = [{transform_indices = @transform_0, window_bounds = array<i64: 1, 16, 64>}, {pipeline_mode = #tpu.pipeline_mode<synchronous>, transform_indices = @transform_1, window_bounds = array<i64: 8, 16>}, {transform_indices = @transform_2, window_bounds = array<i64: 1, 8, 64>}]} {
    %c0 = arith.constant 0 : index
    %c0_0 = arith.constant 0 : index
    %0 = vector.load %arg3[%c0, %c0_0] : memref<8x16xf32, #tpu.memory_space<vmem>>, vector<8x16xf32>
    %c0_1 = arith.constant 0 : index
    %c0_2 = arith.constant 0 : index
    %c0_3 = arith.constant 0 : index
    %1 = vector.load %arg2[%c0_1, %c0_2, %c0_3] : memref<1x16x64xf32, #tpu.memory_space<vmem>>, vector<1x16x64xf32>
    %2 = vector.shape_cast %1 : vector<1x16x64xf32> to vector<16x64xf32>
    %cst = arith.constant dense<0.000000e+00> : vector<8x64xf32>
    %3 = tpu.matmul %0, %2, %cst {dimension_numbers = #tpu.dot_dimension_numbers<[1], [0], [0], [1], [0, 0, 1, 1], [], []>} : vector<8x16xf32>, vector<16x64xf32>, vector<8x64xf32> -> vector<8x64xf32>
    %c0_4 = arith.constant 0 : index
    %c0_5 = arith.constant 0 : index
    %c0_6 = arith.constant 0 : index
    %4 = vector.load %arg4[%c0_4, %c0_5, %c0_6] : memref<1x8x64xf32, #tpu.memory_space<vmem>>, vector<1x8x64xf32>
    %5 = vector.shape_cast %4 : vector<1x8x64xf32> to vector<8x64xf32>
    %6 = vector.shape_cast %3 : vector<8x64xf32> to vector<1x8x64xf32>
    tpu.vector_store %arg4[%c0_4, %c0_5, %c0_6], %6 {strides = array<i32>} : memref<1x8x64xf32, #tpu.memory_space<vmem>>, vector<1x8x64xf32>,
    return
  }
  func.func @transform_0(%arg0: i32, %arg1: i32) -> (i32, i32, i32) {
    %c0_i32 = arith.constant 0 : i32
    %c0_i32_0 = arith.constant 0 : i32
    return %arg0, %c0_i32, %arg1 : i32, i32, i32
  }
  func.func @transform_1(%arg0: i32, %arg1: i32) -> (i32, i32) {
    %c0_i32 = arith.constant 0 : i32
    %c0_i32_0 = arith.constant 0 : i32
    %c0_i32_1 = arith.constant 0 : i32
    return %c0_i32, %c0_i32_0 : i32, i32
  }
  func.func @transform_2(%arg0: i32, %arg1: i32) -> (i32, i32, i32) {
    %c0_i32 = arith.constant 0 : i32
    %c0_i32_0 = arith.constant 0 : i32
    return %arg0, %c0_i32, %arg1 : i32, i32, i32
  }
}

</mosaic_0001>

<llo_original>
// kernel: tpu_custom_call.1
$region0: #{tpu_custom_call.1}
  #allocation0 [shape = 'u32[]', space=smem, size = 0x4, offset = 0x4, fixed_abs, tag = 'smem constant byte address 0x4 - core index']
  #allocation1 [shape = 'u32[144,128]{1,0:T(1,128)}', space=vmem, size = 0x12000, scoped, tag = 'internal scratch']
  %s0 = inlined_call_operand.hbm [shape: f32[2,16,64], index: 0, kind: input, shape index: {}]
  %s1 = inlined_call_operand.hbm [shape: f32[8,16], index: 1, kind: input, shape index: {}]
  %s2 = inlined_call_operand.hbm [shape: f32[2,8,64], index: 2, kind: output, shape index: {}]
  %s3 = sld [smem:[#allocation0]]
  $region49: #{tpu_custom_call.1} parent=0
    _
  %s5 = ssub.s32 1, %s3
  %s6 = scalar_select 0, %s5, %s3
  $region1: #{tpu_custom_call.1} parent=0
    #allocation2 [shape = 'u8[16384]{0}', space=vmem, size = 0x4000, scoped, tag = 'input window, operand 0']
    #allocation3 [shape = 's32[2]{0}', space=sflag, size = 0x8, scoped, tag = 'scoped memory for tpu_custom_call.1']
    #allocation4 [shape = 's32[2]{0}', space=sflag, size = 0x8, scoped, tag = 'scoped memory for tpu_custom_call.1']
    #allocation5 [shape = 'u8[4096]{0}', space=vmem, size = 0x1000, scoped, tag = 'input window, operand 1, single buffered']
    #allocation6 [shape = 's32[1]{0}', space=sflag, size = 0x4, scoped, tag = 'scoped memory for tpu_custom_call.1']
    #allocation7 [shape = 'u8[8192]{0}', space=vmem, size = 0x2000, scoped, tag = 'output window, operand 0']
    %7 = vsyncpa [#allocation3], 0
    %s8 = scalar_lea.sflag [#allocation3], 1
    %9 = vsyncpa %s8, 0
    %10 = vsyncpa [#allocation6], 0
    %11 = vsyncpa [#allocation4], 0
    %s12 = scalar_lea.sflag [#allocation4], 1
    %13 = vsyncpa %s12, 0
    loop: start=0, step=1, limit=4
    $region2: #{tpu_custom_call.1} parent=1 // loop_pre_header
      _
    $region3: #{tpu_custom_call.1} parent=1 // loop_header
      %s15 = sphi 0, %s19
      %p16 = scmp.ge.s32.totalorder %s15, 4
      %s22 = sphi 0, %s34
      %s23 = sphi 0, %s30
      %s24 = sphi 0, %s22
      %s25 = sphi 0, %s23
      %s26 = sphi 0, %s24
      %s27 = sphi 0, %s25
      %s39 = sphi 0, %s41
      %s42 = sphi 0, %s39
      %s43 = sphi 0, %s42
      %s59 = sphi 0, %s43
      %s63 = sphi 0, %s63
      %s65 = sphi 0, %s63
      %s66 = sphi 0, %s65
      %s80 = sphi 0, %s66
      %s88 = sphi 0, %s90
      %s91 = sphi 0, %s88
      %s92 = sphi 0, %s91
      %s108 = sphi 0, %s92
    $region4: #{tpu_custom_call.1} parent=1 // loop_header_branch
      %18 = sbr.rel (%p16) target = $region8
    $region5: #{tpu_custom_call.1} parent=1 // loop_body
      %s20 = ssub.s32 %s15, 1
      %s21 = ssub.s32 %s15, 2
      %s28 = sadd.s32 1, %s23
      %p29 = scmp.ge.s32.totalorder %s28, 1
      %s30 = scalar_select %p29, 0, %s28
      %s31 = sadd.s32 1, %s22
      %s32 = scalar_select %p29, %s31, %s22
      %p33 = scmp.ge.s32.totalorder %s32, 2
      %s34 = scalar_select %p33, 0, %s32
      %s35 = ssub.s32 %s22, %s34
      %s36 = ssub.s32 %s23, %s30
      %s37 = sor.u32 %s35, %s36
      %p38 = scmp.eq.s32.totalorder %s37, 0
      %s40 = sadd.s32 %s39, 1
      %s41 = scalar_select %p38, %s39, %s40
      %p44 = pneg %p38
      %p45 = scmp.eq.s32.totalorder %s15, 1
      %p46 = por %p44, %p45
      %p47 = scmp.ne.s32.totalorder %s39, %s42
      %p48 = scmp.eq.s32.totalorder %s15, 0
      %p49 = por %p47, %p48
      %p50 = scmp.ne.s32.totalorder %s39, %s42
      %p51 = scmp.eq.s32.totalorder %s20, 1
      %p52 = por %p50, %p51
      %p53 = scmp.ne.s32.totalorder %s42, %s43
      %p54 = scmp.eq.s32.totalorder %s20, 0
      %p55 = por %p53, %p54
      %p56 = scmp.ne.s32.totalorder %s42, %s43
      %p57 = scmp.eq.s32.totalorder %s21, 1
      %p58 = por %p56, %p57
      %p60 = scmp.ne.s32.totalorder %s43, %s59
      %p61 = scmp.eq.s32.totalorder %s21, 0
      %p62 = por %p60, %p61
      %s64 = sadd.s32 %s63, 1
      %p67 = scmp.eq.s32.totalorder %s15, 1
      %p68 = scmp.ne.s32.totalorder %s63, %s65
      %p69 = scmp.eq.s32.totalorder %s15, 0
      %p70 = por %p68, %p69
      %p71 = scmp.ne.s32.totalorder %s63, %s65
      %p72 = scmp.eq.s32.totalorder %s20, 1
      %p73 = por %p71, %p72
      %p74 = scmp.ne.s32.totalorder %s65, %s66
      %p75 = scmp.eq.s32.totalorder %s20, 0
      %p76 = por %p74, %p75
      %p77 = scmp.ne.s32.totalorder %s65, %s66
      %p78 = scmp.eq.s32.totalorder %s21, 1
      %p79 = por %p77, %p78
      %p81 = scmp.ne.s32.totalorder %s66, %s80
      %p82 = scmp.eq.s32.totalorder %s21, 0
      %p83 = por %p81, %p82
      %s84 = ssub.s32 %s22, %s34
      %s85 = ssub.s32 %s23, %s30
      %s86 = sor.u32 %s84, %s85
      %p87 = scmp.eq.s32.totalorder %s86, 0
      %s89 = sadd.s32 %s88, 1
      %s90 = scalar_select %p87, %s88, %s89
      %p93 = pneg %p87
      %p94 = scmp.eq.s32.totalorder %s15, 1
      %p95 = por %p93, %p94
      %p96 = scmp.ne.s32.totalorder %s88, %s91
      %p97 = scmp.eq.s32.totalorder %s15, 0
      %p98 = por %p96, %p97
      %p99 = scmp.ne.s32.totalorder %s88, %s91
      %p100 = scmp.eq.s32.totalorder %s20, 1
      %p101 = por %p99, %p100
      %p102 = scmp.ne.s32.totalorder %s91, %s92
      %p103 = scmp.eq.s32.totalorder %s20, 0
      %p104 = por %p102, %p103
      %p105 = scmp.ne.s32.totalorder %s91, %s92
      %p106 = scmp.eq.s32.totalorder %s21, 1
      %p107 = por %p105, %p106
      %p109 = scmp.ne.s32.totalorder %s92, %s108
      %p110 = scmp.eq.s32.totalorder %s21, 0
      %p111 = por %p109, %p110
      %p112 = scmp.le.s32.totalorder 1, %s15
      %p113 = scmp.lt.s32.totalorder %s15, 3
      %p114 = pnand %p112, %p113
      %p115 = pneg %p114
      // Predicated region
      $region9: #{tpu_custom_call.1} parent=5 // pred_check
        _
      $region10: #{tpu_custom_call.1} parent=5 // pred_check_branch
        %117 = sbr.rel (%p114) target = $region12
      $region11: #{tpu_custom_call.1} parent=5 // pred_region
        %s118 = ssub.s32 %s15, 1
        // Predicated region
        $region13: #{tpu_custom_call.1} parent=11 // pred_check
          %p119 = pneg %p76
        $region14: #{tpu_custom_call.1} parent=11 // pred_check_branch
          %121 = sbr.rel (%p119) target = $region16
        $region15: #{tpu_custom_call.1} parent=11 // pred_region
          %s123 = ssub.s32 128, 128
          %124 = vsyncadd [#allocation6], %s123
          %s126 = sshll.u32 [#allocation5], 4
          %s127 = int_to_ptr.vmem [resolvable:$true] %s126
          %129 = dma.hbm_to_vmem [thread:$0]  %s1, 128, %s127, [#allocation6]
        $region16: #{tpu_custom_call.1} parent=11 // pred_fallthru
          _
      $region12: #{tpu_custom_call.1} parent=5 // pred_fallthru
        _
      %p130 = scmp.lt.s32.totalorder %s15, 2
      // Predicated region
      $region17: #{tpu_custom_call.1} parent=5 // pred_check
        %p131 = pneg %p130
      $region18: #{tpu_custom_call.1} parent=5 // pred_check_branch
        %133 = sbr.rel (%p131) target = $region20
      $region19: #{tpu_custom_call.1} parent=5 // pred_region
        // Predicated region
        $region21: #{tpu_custom_call.1} parent=19 // pred_check
          %p134 = pneg %p49
        $region22: #{tpu_custom_call.1} parent=19 // pred_check_branch
          %136 = sbr.rel (%p134) target = $region24
        $region23: #{tpu_custom_call.1} parent=19 // pred_region
          %s137 = sand.u32 %s39, 1
          %s138 = scalar_lea.sflag [#allocation3], %s137
          %s139 = sand.u32 %s39, 1
          %s140 = smul.addr %s139, 16
          %s141 = scalar_lea.vmem [#allocation2], %s140
          %s143 = ssub.s32 256, 256
          %144 = vsyncadd %s138, %s143
          %s145 = smul.addr %s22, 2
          %s146 = sadd.s32 %s23, %s145
          %s147 = smul.addr %s146, 128
          %s148 = scalar_lea.hbm %s0, %s147
          %s149 = sshll.u32 %s141, 4
          %s150 = int_to_ptr.vmem [resolvable:$true] %s149
          %155 = dma.hbm_to_vmem [thread:$0]  %s148, 256, %s150, %s138, 128, 128, 8
        $region24: #{tpu_custom_call.1} parent=19 // pred_fallthru
          _
      $region20: #{tpu_custom_call.1} parent=5 // pred_fallthru
        _
      %p156 = scmp.le.s32.totalorder 1, %s15
      %p157 = scmp.lt.s32.totalorder %s15, 3
      %p158 = pnand %p156, %p157
      %p159 = pneg %p158
      // Predicated region
      $region25: #{tpu_custom_call.1} parent=5 // pred_check
        _
      $region26: #{tpu_custom_call.1} parent=5 // pred_check_branch
        %161 = sbr.rel (%p158) target = $region28
      $region27: #{tpu_custom_call.1} parent=5 // pred_region
        %s162 = ssub.s32 %s15, 1
        %s163 = sand.u32 %s42, 1
        %s164 = scalar_lea.sflag [#allocation3], %s163
        %s165 = sand.u32 %s42, 1
        %s166 = smul.addr %s165, 16
        %s167 = scalar_lea.vmem [#allocation2], %s166
        // Predicated region
        $region29: #{tpu_custom_call.1} parent=27 // pred_check
          %p168 = pneg %p55
        $region30: #{tpu_custom_call.1} parent=27 // pred_check_branch
          %170 = sbr.rel (%p168) target = $region32
        $region31: #{tpu_custom_call.1} parent=27 // pred_region
          %171 = dma.done %s164, 256
        $region32: #{tpu_custom_call.1} parent=27 // pred_fallthru
          _
        // Predicated region
        $region33: #{tpu_custom_call.1} parent=27 // pred_check
          %p172 = pneg %p76
        $region34: #{tpu_custom_call.1} parent=27 // pred_check_branch
          %174 = sbr.rel (%p172) target = $region36
        $region35: #{tpu_custom_call.1} parent=27 // pred_region
          %175 = dma.done [#allocation6], 128
        $region36: #{tpu_custom_call.1} parent=27 // pred_fallthru
          _
        %s176 = sand.u32 %s42, 1
        %s177 = scalar_lea.sflag [#allocation3], %s176
        %s178 = sand.u32 %s42, 1
        %s179 = smul.addr %s178, 16
        %s180 = scalar_lea.vmem [#allocation2], %s179
        %p181 = pneg %p55
        %p182 = pneg %p52
        %p183 = pneg %p76
        %p184 = pneg %p73
        %p185 = pneg %p104
        %p186 = pneg %p101
        %s187 = sand.u32 %s91, 1
        %s188 = scalar_lea.sflag [#allocation4], %s187
        %s189 = sand.u32 %s91, 1
        %s190 = smul.addr %s189, 8
        %s191 = scalar_lea.vmem [#allocation7], %s190
        %v192 = vld [vmem:[#allocation5] sm:$0xff]
        %v193 = vld [vmem:[%s167] sm:$0xff]
        %v194 = vld [vmem:[%s167 + $0x8] sm:$0xff]
        %vm195 = vcmask 130048
        %v197 = vsel %vm195, %v192, 0
        %199 = vmatprep.subr.mxu0 0.0
        %200 = vmatpush1.msra.mxu0 %v193
        %201 = vmatprep.subr.mxu0 0.0
        %202 = vmatpush1.msra.mxu0 %v194
        %203 = vmatprep.subr.mxu0 0.0
        %204 = vmatpush1.msra.mxu0 0.0
        %205 = vmatprep.subr.mxu0 0.0
        %206 = vmatpush1.msra.mxu0 0.0
        %207 = vmatprep.subr.mxu0 0.0
        %208 = vmatpush1.msra.mxu0 0.0
        %209 = vmatprep.subr.mxu0 0.0
        %210 = vmatpush1.msra.mxu0 0.0
        %211 = vmatprep.subr.mxu0 0.0
        %212 = vmatpush1.msra.mxu0 0.0
        %213 = vmatprep.subr.mxu0 0.0
        %214 = vmatpush1.msra.mxu0 0.0
        %215 = vmatprep.subr.mxu0 0.0
        %216 = vmatpush1.msra.mxu0 0.0
        %217 = vmatprep.subr.mxu0 0.0
        %218 = vmatpush1.msra.mxu0 0.0
        %219 = vmatprep.subr.mxu0 0.0
        %220 = vmatpush1.msra.mxu0 0.0
        %221 = vmatprep.subr.mxu0 0.0
        %222 = vmatpush1.msra.mxu0 0.0
        %223 = vmatprep.subr.mxu0 0.0
        %224 = vmatpush1.msra.mxu0 0.0
        %225 = vmatprep.subr.mxu0 0.0
        %226 = vmatpush1.msra.mxu0 0.0
        %227 = vmatprep.subr.mxu0 0.0
        %228 = vmatpush1.msra.mxu0 0.0
        %229 = vmatprep.subr.mxu0 0.0
        %230 = vmatpush1.msra.mxu0 0.0
        %231 = vmatprep.subr.mxu0 0.0
        %232 = vmatpush1.msra.mxu0 0.0
        %233 = vmatprep.subr.mxu0 0.0
        %234 = vmatpush1.msra.mxu0 0.0
        %235 = vmatprep.subr.mxu0 0.0
        %236 = vmatpush1.msra.mxu0 0.0
        %237 = vmatprep.subr.mxu0 0.0
        %238 = vmatpush1.msra.mxu0 0.0
        %239 = vmatprep.subr.mxu0 0.0
        %240 = vmatpush1.msra.mxu0 0.0
        %241 = vmatprep.subr.mxu0 0.0
        %242 = vmatpush1.msra.mxu0 0.0
        %243 = vmatprep.subr.mxu0 0.0
        %244 = vmatpush1.msra.mxu0 0.0
        %245 = vmatprep.subr.mxu0 0.0
        %246 = vmatpush1.msra.mxu0 0.0
        %247 = vmatprep.subr.mxu0 0.0
        %248 = vmatpush1.msra.mxu0 0.0
        %249 = vmatprep.subr.mxu0 0.0
        %250 = vmatpush1.msra.mxu0 0.0
        %251 = vmatprep.subr.mxu0 0.0
        %252 = vmatpush1.msra.mxu0 0.0
        %253 = vmatprep.subr.mxu0 0.0
        %254 = vmatpush1.msra.mxu0 0.0
        %255 = vmatprep.subr.mxu0 0.0
        %256 = vmatpush1.msra.mxu0 0.0
        %257 = vmatprep.subr.mxu0 0.0
        %258 = vmatpush1.msra.mxu0 0.0
        %259 = vmatprep.subr.mxu0 0.0
        %260 = vmatpush1.msra.mxu0 0.0
        %261 = vmatprep.subr.mxu0 0.0
        %262 = vmatpush1.msra.mxu0 0.0
        %263 = vmatprep.mubr.f32.mxu0 0.0
        %264 = vmatmul.mubr.f32.gmra.mrb[0].mxu0 %v197
        %v265 = vpop.f32.mrb[0].mxu0
        %v266 = vadd.f32 0.0, %v265
        %v267 = vpop.f32.mrb[0].mxu0
        %268 = vdwg.mxu0
        %vm269 = vcmask 523264
        %270 = vst.msk [vmem:[%s191] sm:$0xff] %vm269, %v266
        %s271 = sand.u32 %s91, 1
        %s272 = scalar_lea.sflag [#allocation4], %s271
        %s273 = sand.u32 %s91, 1
        %s274 = smul.addr %s273, 8
        %s275 = scalar_lea.vmem [#allocation7], %s274
        // Predicated region
        $region37: #{tpu_custom_call.1} parent=27 // pred_check
          %p276 = pneg %p101
        $region38: #{tpu_custom_call.1} parent=27 // pred_check_branch
          %278 = sbr.rel (%p276) target = $region40
        $region39: #{tpu_custom_call.1} parent=27 // pred_region
          %s280 = ssub.s32 128, 128
          %281 = vsyncadd %s272, %s280
          %s282 = sadd.s32 %s25, %s24
          %s283 = smul.addr %s282, 128
          %s284 = scalar_lea.hbm %s2, %s283
          %s286 = sshll.u32 %s275, 4
          %s287 = int_to_ptr.vmem [resolvable:$true] %s286
          %289 = dma.vmem_to_hbm [thread:$0]  %s287, 128, %s284, %s272
        $region40: #{tpu_custom_call.1} parent=27 // pred_fallthru
          _
      $region28: #{tpu_custom_call.1} parent=5 // pred_fallthru
        _
      %p290 = scmp.le.s32.totalorder 2, %s15
      // Predicated region
      $region41: #{tpu_custom_call.1} parent=5 // pred_check
        %p291 = pneg %p290
      $region42: #{tpu_custom_call.1} parent=5 // pred_check_branch
        %293 = sbr.rel (%p291) target = $region44
      $region43: #{tpu_custom_call.1} parent=5 // pred_region
        %s294 = ssub.s32 %s15, 2
        // Predicated region
        $region45: #{tpu_custom_call.1} parent=43 // pred_check
          %p295 = pneg %p107
        $region46: #{tpu_custom_call.1} parent=43 // pred_check_branch
          %297 = sbr.rel (%p295) target = $region48
        $region47: #{tpu_custom_call.1} parent=43 // pred_region
          %s298 = sand.u32 %s92, 1
          %s299 = scalar_lea.sflag [#allocation4], %s298
          %s300 = sand.u32 %s92, 1
          %s301 = smul.addr %s300, 8
          %s302 = scalar_lea.vmem [#allocation7], %s301
          %303 = dma.done %s299, 128
        $region48: #{tpu_custom_call.1} parent=43 // pred_fallthru
          _
      $region44: #{tpu_custom_call.1} parent=5 // pred_fallthru
        _
    $region6: #{tpu_custom_call.1} parent=1 // loop_footer
      %s19 = sadd.s32 1, %s15
    $region7: #{tpu_custom_call.1} parent=1 // loop_footer_branch
      %14 = sbr.rel target = $region3
    $region8: #{tpu_custom_call.1} parent=1 // loop_exit
      _
    %304 = vsyncpa [#allocation3], 1
    %s305 = scalar_lea.sflag [#allocation3], 1
    %306 = vsyncpa %s305, 1
    %307 = vsyncpa [#allocation6], 1
    %308 = vsyncpa [#allocation4], 1
    %s309 = scalar_lea.sflag [#allocation4], 1
    %310 = vsyncpa %s309, 1

</llo_original>
